<compile_context>
chip_gen: v6e
topology: v6e:2x2x1
jax: 0.10.0
libtpu: 0.0.40
codegen_flags: <defaults>
</compile_context>

<pallas_src>
import functools

import jax
import jax.numpy as jnp
from jax.experimental import pallas as pl
from jax.experimental.pallas import tpu as pltpu


def _round_up(x, m):
    return ((x + m - 1) // m) * m


def _k_padded(K):
    """K padding rule shared by __init__ (weight rows) and the kernel wrapper."""
    if K <= 1024:
        return _round_up(K, 16)      # single K step, 16-aligned for bf16 packing
    return _round_up(K, 512)         # K-tiled with tk=512


def _fused_linear_kernel(x_ref, w_ref, b_ref, o_ref, acc_ref):
    # x_ref: (TM, TK)  w_ref: (TK, O_pad)  b_ref: (1, O_pad) f32
    # o_ref: (TM, O_pad) out_dtype         acc_ref: (TM, O_pad) f32 scratch
    k = pl.program_id(1)

    @pl.when(k == 0)
    def _():
        acc_ref[...] = jnp.zeros_like(acc_ref)

    acc_ref[...] += jnp.dot(
        x_ref[...], w_ref[...], preferred_element_type=jnp.float32
    )

    @pl.when(k == pl.num_programs(1) - 1)
    def _():
        o_ref[...] = (acc_ref[...] + b_ref[...]).astype(o_ref.dtype)


def fused_linear_pallas(x2d, w_fused, b_fused, *, compute_dtype, out_dtype):
    """y = x2d @ w_fused + b_fused as one tiled Pallas TPU matmul.

    x2d:     [M, K] f32 activations (rows = batch * nodes)
    w_fused: [K_pad, O_pad] fused weight, already in compute_dtype,
             K_pad = _k_padded(K), O_pad % 128 == 0 (zero padding)
    b_fused: [1, O_pad] f32 fused bias (zero in padded columns)
    returns  [M, O_pad] out_dtype (caller slices valid rows / columns)
    """
    M, K = x2d.shape
    K_pad, O_pad = w_fused.shape
    assert O_pad % 128 == 0, "output lane dim must be a multiple of 128"
    assert K_pad == _k_padded(K) and K_pad >= K

    # K tiling: whole (padded) K when small, tk=512 otherwise.
    tk = K_pad if K_pad <= 1024 else 512
    assert K_pad % tk == 0
    k_steps = K_pad // tk

    # Row tiling: 512 for large M (mem-bound: big tiles amortize the ~0.35 us
    # per-step overhead and reach ~85% of HBM roofline); whole 16-aligned row
    # count for tiny M -> a single grid step.
    M16 = _round_up(M, 16)
    row_tile = min(512, M16)
    M_pad = _round_up(M, row_tile)
    m_steps = M_pad // row_tile

    # Pad rows / K columns inside the enclosing jit so XLA fuses it with the
    # concat that produced x2d; cast activations to the compute dtype.
    x_p = x2d
    if (M_pad, K_pad) != (M, K):
        x_p = jnp.pad(x_p, ((0, M_pad - M), (0, K_pad - K)))
    x_p = x_p.astype(compute_dtype)
    w_fused = w_fused.astype(compute_dtype)  # no-op: pre-cast in __init__

    # Explicit scoped-VMEM budget (v5e default is only 16 MiB): double-buffered
    # x/out tiles + weight/bias buffers + f32 accumulator, with headroom.
    x_it = jnp.dtype(compute_dtype).itemsize
    o_it = jnp.dtype(out_dtype).itemsize
    need = (
        2 * row_tile * tk * x_it        # x tiles (double-buffered)
        + 2 * tk * O_pad * x_it         # weight tiles
        + 2 * O_pad * 4                 # bias
        + 2 * row_tile * O_pad * o_it   # out tiles
        + row_tile * O_pad * 4          # f32 accumulator scratch
    )
    vmem_limit = int(min(48 * 2**20, max(32 * 2**20, 2 * need)))

    out = pl.pallas_call(
        _fused_linear_kernel,
        out_shape=jax.ShapeDtypeStruct((M_pad, O_pad), out_dtype),
        grid_spec=pltpu.PrefetchScalarGridSpec(
            num_scalar_prefetch=0,
            grid=(m_steps, k_steps),
            in_specs=[
                pl.BlockSpec((row_tile, tk), lambda i, k: (i, k)),
                # Weight / bias block index independent of the row step -> DMA
                # hoisted across row iterations by the pipeliner.
                pl.BlockSpec((tk, O_pad), lambda i, k: (k, 0)),
                pl.BlockSpec((1, O_pad), lambda i, k: (0, 0)),
            ],
            out_specs=pl.BlockSpec((row_tile, O_pad), lambda i, k: (i, 0)),
            scratch_shapes=[pltpu.VMEM((row_tile, O_pad), jnp.float32)],
        ),
        compiler_params=pltpu.CompilerParams(
            # Row axis is independent work; K axis carries the accumulator.
            # On v7x with >=2 row steps this can be pltpu.CORE_PARALLEL for
            # explicit two-TensorCore sharding; "parallel" kept for portability.
            dimension_semantics=("parallel", "arbitrary"),
            vmem_limit_bytes=vmem_limit,
        ),
    )(x_p, w_fused, b_fused)
    return out[:M]


def _init_linear(key, in_dim, out_dim):
    """Deterministic init mirroring nn.Linear(in_dim, out_dim) shapes."""
    kw, kb = jax.random.split(key)
    bound = 1.0 / jnp.sqrt(jnp.float32(in_dim))
    w = jax.random.uniform(kw, (out_dim, in_dim), jnp.float32, -bound, bound)
    b = jax.random.uniform(kb, (out_dim,), jnp.float32, -bound, bound)
    return w.T, b  # store transposed: [in, out]


class GeneralRNNGPallas:
    """Pallas-backed parameter/compute container for GeneralRNNG.setup_nt."""

    def __init__(self, input_dim, w_dim, strategy="top_down", key=None,
                 compute_dtype=jnp.bfloat16, out_dtype=None,
                 pallas_min_out_bytes=1 << 20):
        assert strategy in ("top_down", "in_order")
        # TopDownActionDict(['DUMMY']): <pad>, SHIFT, REDUCE, NT(..) -> nt_begin_id()==3
        # InOrderActionDict adds FINISH -> 4
        self.nt_begin_id = 3 if strategy == "top_down" else 4
        self.input_dim = input_dim
        self.w_dim = w_dim
        self.compute_dtype = compute_dtype
        # bf16 output halves writeback bytes (dominant term when K is small);
        # accumulation stays f32 inside the kernel.
        self.out_dtype = compute_dtype if out_dtype is None else out_dtype
        # Below this output size the fused projection is pure launch overhead;
        # use a plain XLA dot inside the same jit instead of pallas_call.
        self.pallas_min_out_bytes = pallas_min_out_bytes

        if key is None:
            key = jax.random.PRNGKey(0)
        k0, k1, k2, k3, k4 = jax.random.split(key, 5)

        # nn.Embedding(nt_begin_id, input_dim)
        self.special_action_embedding = jax.random.normal(
            k0, (self.nt_begin_id, input_dim), jnp.float32
        )
        # Canonical f32 parameters (nn.Linear(input_dim, w_dim) x3, (.., 2*w_dim)).
        self.W_action_t, self.b_action = _init_linear(k1, input_dim, w_dim)
        self.W_nt_t, self.b_nt = _init_linear(k2, input_dim, w_dim)
        self.W_comp_t, self.b_comp = _init_linear(k3, input_dim, w_dim)
        self.W_comp2_t, self.b_comp2 = _init_linear(k4, input_dim, 2 * w_dim)

        # Fuse the four projections along the output axis into one matmul.
        # Lane-pad the output width to a multiple of 128 (unmasked stores);
        # prefer w_dim with 5*w_dim % 128 == 0 so this padding is zero.
        w_fused = jnp.concatenate(
            [self.W_action_t, self.W_nt_t, self.W_comp_t, self.W_comp2_t], axis=1
        )  # [input_dim, 5*w_dim]
        b_fused = jnp.concatenate(
            [self.b_action, self.b_nt, self.b_comp, self.b_comp2], axis=0
        )
        self.o_total = 5 * w_dim
        self.o_pad = _round_up(self.o_total, 128)
        self.k_pad = _k_padded(input_dim)
        col_pad = self.o_pad - self.o_total
        row_pad = self.k_pad - input_dim
        # Pre-cast the fused weight ONCE to the compute dtype (avoids a per-call
        # materialized cast inside the jit); bias stays f32 for exact add.
        self.W_fused = jnp.pad(
            w_fused, ((0, row_pad), (0, col_pad))
        ).astype(self.compute_dtype)                       # [k_pad, o_pad]
        self.b_fused = jnp.pad(b_fused, (0, col_pad)).reshape(1, self.o_pad)

    # ---- compute ----------------------------------------------------------

    def _compute_fused(self, nt_features):
        """Fused [B, nt_begin_id + N, o_pad] projection slab (inside jit)."""
        B, N, D = nt_features.shape
        assert D == self.input_dim
        nb = self.nt_begin_id

        # emb = cat([special_action_embedding.weight.expand(B,-1,-1), nt_features], 1)
        special = jnp.broadcast_to(self.special_action_embedding[None], (B, nb, D))
        emb = jnp.concatenate([special, nt_features], axis=1)   # [B, nb+N, D]
        x2d = emb.reshape(-1, D)
        M = B * (nb + N)

        out_bytes = M * self.o_pad * jnp.dtype(self.out_dtype).itemsize
        if out_bytes < self.pallas_min_out_bytes:
            # Small-M fallback: XLA fused dot, no pallas dispatch / padding cost.
            y = jnp.dot(
                x2d.astype(self.compute_dtype), self.W_fused[:D],
                preferred_element_type=jnp.float32,
            ) + self.b_fused
            fused = y.astype(self.out_dtype)
        else:
            fused = fused_linear_pallas(
                x2d, self.W_fused, self.b_fused,
                compute_dtype=self.compute_dtype, out_dtype=self.out_dtype,
            )
        return fused.reshape(B, nb + N, self.o_pad)

    @functools.partial(jax.jit, static_argnums=(0,))
    def setup_nt_fused(self, nt_features):
        """Recommended API: returns the single fused slab [B, nb+N, o_pad].

        Column layout: [0:w]=action, [w:2w]=nt_emb, [2w:3w]=composition_nt_emb,
        [3w:5w]=composition_nt_emb2 (nt/comp tables use rows nb:).  Slice at the
        consumer inside a larger jit so the slices fuse (no extra HBM pass).
        """
        return self._compute_fused(nt_features)

    @functools.partial(jax.jit, static_argnums=(0,))
    def setup_nt(self, nt_features):
        """PyTorch-API-shaped tables.  NOTE: emitting four sliced jit outputs
        re-reads/re-writes the fused slab (~2x HBM traffic); prefer
        setup_nt_fused when composing into a larger jitted program."""
        fused = self._compute_fused(nt_features)
        nb, w = self.nt_begin_id, self.w_dim
        return {
            "action_mlp_weight": fused[:, :, 0 * w:1 * w],   # [B, nb+N, w]
            "nt_emb": fused[:, nb:, 1 * w:2 * w],             # [B, N, w]
            "composition_nt_emb": fused[:, nb:, 2 * w:3 * w], # [B, N, w]
            "composition_nt_emb2": fused[:, nb:, 3 * w:5 * w],# [B, N, 2w]
        }

    def forward(self, token_ids, action_ids, max_stack_size, subword_end_mask=None):
        # TODO(synk): delegates to the external FixedStackRNNG stack-LSTM model
        # (dynamic parse loop, CE losses, beam search) — not part of this module.
        raise NotImplementedError("RNNG core forward is external to GeneralRNNG")


def _reference_setup_nt(model, nt_features):
    """Plain-JAX f32 reference (un-fused weights) for correctness checking."""
    B, N, D = nt_features.shape
    special = jnp.broadcast_to(
        model.special_action_embedding[None], (B, model.nt_begin_id, D)
    )
    emb = jnp.concatenate([special, nt_features], axis=1)
    return {
        "action_mlp_weight": emb @ model.W_action_t + model.b_action,
        "nt_emb": nt_features @ model.W_nt_t + model.b_nt,
        "composition_nt_emb": nt_features @ model.W_comp_t + model.b_comp,
        "composition_nt_emb2": nt_features @ model.W_comp2_t + model.b_comp2,
    }


def _check(out, ref, atol, rtol):
    for name in ref:
        got = out[name].astype(jnp.float32)
        assert got.shape == ref[name].shape, name
        assert jnp.allclose(got, ref[name], atol=atol, rtol=rtol), name


if __name__ == "__main__":
    key = jax.random.PRNGKey(0)
    k_feat, k_model = jax.random.split(key)

    batch, nt_num_nodes, input_dim, w_dim = 2, 8, 32, 32
    nt_features = jax.random.normal(
        k_feat, (batch, nt_num_nodes, input_dim), jnp.float32
    )

    # ---- 1) f32 compute/out, Pallas path forced: tight numerical check -----
    model_f32 = GeneralRNNGPallas(
        input_dim, w_dim, strategy="top_down", key=k_model,
        compute_dtype=jnp.float32, out_dtype=jnp.float32,
        pallas_min_out_bytes=0,  # force the Pallas kernel even at tiny M
    )
    out_f32 = model_f32.setup_nt(nt_features)
    jax.block_until_ready(out_f32)

    nb = model_f32.nt_begin_id
    assert out_f32["action_mlp_weight"].shape == (batch, nb + nt_num_nodes, w_dim)
    assert out_f32["nt_emb"].shape == (batch, nt_num_nodes, w_dim)
    assert out_f32["composition_nt_emb"].shape == (batch, nt_num_nodes, w_dim)
    assert out_f32["composition_nt_emb2"].shape == (batch, nt_num_nodes, 2 * w_dim)

    ref = _reference_setup_nt(model_f32, nt_features)
    _check(out_f32, ref, atol=1e-5, rtol=1e-5)

    # ---- 2) default bf16 compute/out, Pallas path forced: loose check ------
    model_bf16 = GeneralRNNGPallas(
        input_dim, w_dim, strategy="top_down", key=k_model,
        pallas_min_out_bytes=0,
    )
    out_bf16 = model_bf16.setup_nt(nt_features)
    jax.block_until_ready(out_bf16)
    _check(out_bf16, ref, atol=3e-2, rtol=3e-2)

    # Fused-slab API (the recommended consumer path).
    fused = model_bf16.setup_nt_fused(nt_features)
    jax.block_until_ready(fused)
    assert fused.shape == (batch, nb + nt_num_nodes, model_bf16.o_pad)

    # ---- 3) all-default model: small-M XLA fallback path --------------------
    model_def = GeneralRNNGPallas(input_dim, w_dim, strategy="top_down", key=k_model)
    out_def = model_def.setup_nt(nt_features)
    jax.block_until_ready(out_def)
    _check(out_def, ref, atol=3e-2, rtol=3e-2)

    print("KERNEL_OK")
</pallas_src>

<mosaic_0001>
module attributes {stable_mosaic.version = 11 : i64} {
  func.func @_fused_linear_kernel(%arg0: i32, %arg1: i32, %arg2: memref<32x32xf32, #tpu.memory_space<vmem>>, %arg3: memref<32x256xf32, #tpu.memory_space<vmem>>, %arg4: memref<1x256xf32, #tpu.memory_space<vmem>>, %arg5: memref<32x256xf32, #tpu.memory_space<vmem>>, %arg6: memref<32x256xf32, #tpu.memory_space<vmem>>) attributes {dimension_semantics = [#tpu.dimension_semantics<parallel>, #tpu.dimension_semantics<arbitrary>], iteration_bounds = array<i64: 1, 1>, scalar_prefetch = 0 : i64, scratch_operands = 1 : i64, tpu.core_type = #tpu.core_type<tc>, window_params = [{transform_indices = @transform_0, window_bounds = array<i64: 32, 32>}, {transform_indices = @transform_1, window_bounds = array<i64: 32, 256>}, {pipeline_mode = #tpu.pipeline_mode<synchronous>, transform_indices = @transform_2, window_bounds = array<i64: 1, 256>}, {transform_indices = @transform_3, window_bounds = array<i64: 32, 256>}]} {
    %c0_i32 = arith.constant 0 : i32
    %0 = arith.cmpi eq, %arg1, %c0_i32 : i32
    %1 = arith.extui %0 : i1 to i32
    %c0_i32_0 = arith.constant 0 : i32
    %2 = arith.cmpi ne, %1, %c0_i32_0 : i32
    scf.if %2 {
      %cst_10 = arith.constant 0.000000e+00 : f32
      %12 = vector.broadcast %cst_10 : f32 to vector<32x256xf32>
      %c0_11 = arith.constant 0 : index
      %c0_12 = arith.constant 0 : index
      %13 = vector.load %arg6[%c0_11, %c0_12] : memref<32x256xf32, #tpu.memory_space<vmem>>, vector<32x256xf32>
      tpu.vector_store %arg6[%c0_11, %c0_12], %12 {strides = array<i32>} : memref<32x256xf32, #tpu.memory_space<vmem>>, vector<32x256xf32>,
    } else {
    }
    %c0 = arith.constant 0 : index
    %c0_1 = arith.constant 0 : index
    %3 = vector.load %arg6[%c0, %c0_1] : memref<32x256xf32, #tpu.memory_space<vmem>>, vector<32x256xf32>
    %c0_2 = arith.constant 0 : index
    %c0_3 = arith.constant 0 : index
    %4 = vector.load %arg2[%c0_2, %c0_3] : memref<32x32xf32, #tpu.memory_space<vmem>>, vector<32x32xf32>
    %c0_4 = arith.constant 0 : index
    %c0_5 = arith.constant 0 : index
    %5 = vector.load %arg3[%c0_4, %c0_5] : memref<32x256xf32, #tpu.memory_space<vmem>>, vector<32x256xf32>
    %cst = arith.constant dense<0.000000e+00> : vector<32x256xf32>
    %6 = tpu.matmul %4, %5, %cst {dimension_numbers = #tpu.dot_dimension_numbers<[1], [0], [0], [1], [0, 0, 1, 1], [], []>} : vector<32x32xf32>, vector<32x256xf32>, vector<32x256xf32> -> vector<32x256xf32>
    %7 = arith.addf %3, %6 : vector<32x256xf32>
    %c0_6 = arith.constant 0 : index
    %c0_7 = arith.constant 0 : index
    %8 = vector.load %arg6[%c0_6, %c0_7] : memref<32x256xf32, #tpu.memory_space<vmem>>, vector<32x256xf32>
    tpu.vector_store %arg6[%c0_6, %c0_7], %7 {strides = array<i32>} : memref<32x256xf32, #tpu.memory_space<vmem>>, vector<32x256xf32>,
    %c0_i32_8 = arith.constant 0 : i32
    %9 = arith.cmpi eq, %arg1, %c0_i32_8 : i32
    %10 = arith.extui %9 : i1 to i32
    %c0_i32_9 = arith.constant 0 : i32
    %11 = arith.cmpi ne, %10, %c0_i32_9 : i32
    scf.if %11 {
      %c0_10 = arith.constant 0 : index
      %c0_11 = arith.constant 0 : index
      %12 = vector.load %arg6[%c0_10, %c0_11] : memref<32x256xf32, #tpu.memory_space<vmem>>, vector<32x256xf32>
      %c0_12 = arith.constant 0 : index
      %c0_13 = arith.constant 0 : index
      %13 = vector.load %arg4[%c0_12, %c0_13] : memref<1x256xf32, #tpu.memory_space<vmem>>, vector<1x256xf32>
      %14 = vector.broadcast %13 : vector<1x256xf32> to vector<32x256xf32>
      %15 = arith.addf %12, %14 : vector<32x256xf32>
      %c0_14 = arith.constant 0 : index
      %c0_15 = arith.constant 0 : index
      %16 = vector.load %arg5[%c0_14, %c0_15] : memref<32x256xf32, #tpu.memory_space<vmem>>, vector<32x256xf32>
      tpu.vector_store %arg5[%c0_14, %c0_15], %15 {strides = array<i32>} : memref<32x256xf32, #tpu.memory_space<vmem>>, vector<32x256xf32>,
    } else {
    }
    return
  }
  func.func @transform_0(%arg0: i32, %arg1: i32) -> (i32, i32) {
    %c0_i32 = arith.constant 0 : i32
    return %arg0, %arg1 : i32, i32
  }
  func.func @transform_1(%arg0: i32, %arg1: i32) -> (i32, i32) {
    %c0_i32 = arith.constant 0 : i32
    %c0_i32_0 = arith.constant 0 : i32
    return %arg1, %c0_i32 : i32, i32
  }
  func.func @transform_2(%arg0: i32, %arg1: i32) -> (i32, i32) {
    %c0_i32 = arith.constant 0 : i32
    %c0_i32_0 = arith.constant 0 : i32
    %c0_i32_1 = arith.constant 0 : i32
    return %c0_i32, %c0_i32_0 : i32, i32
  }
  func.func @transform_3(%arg0: i32, %arg1: i32) -> (i32, i32) {
    %c0_i32 = arith.constant 0 : i32
    %c0_i32_0 = arith.constant 0 : i32
    return %arg0, %c0_i32 : i32, i32
  }
}

</mosaic_0001>

<llo_original>
// kernel: setup_nt.1
$region0: #{setup_nt.1}
  #allocation0 [shape = 'u32[]', space=smem, size = 0x4, offset = 0x4, fixed_abs, tag = 'smem constant byte address 0x4 - core index']
  #allocation1 [shape = 'u32[144,128]{1,0:T(1,128)}', space=vmem, size = 0x12000, scoped, tag = 'internal scratch']
  #allocation2 [shape = 'f32[32,256]{1,0:T(8,128)}', space=vmem, size = 0x8000, scoped, tag = 'scratch operand']
  %s0 = inlined_call_operand.vmem [shape: f32[32,32], index: 0, kind: input, shape index: {}]
  %s1 = inlined_call_operand.vmem [shape: f32[32,256], index: 1, kind: input, shape index: {}]
  %s2 = inlined_call_operand.vmem [shape: f32[1,256], index: 2, kind: input, shape index: {}]
  %s3 = inlined_call_operand.vmem [shape: f32[32,256], index: 3, kind: output, shape index: {}]
  %s4 = sld [smem:[#allocation0]]
  $region30: #{setup_nt.1} parent=0
    _
  %s6 = ssub.s32 1, %s4
  %s7 = scalar_select 0, %s6, %s4
  // Predicated region
  $region2: #{setup_nt.1} parent=0 // pred_check
    _
  $region3: #{setup_nt.1} parent=0 // pred_check_branch
    %9 = sbr.rel (0) target = $region5
  $region4: #{setup_nt.1} parent=0 // pred_region
    _
  $region5: #{setup_nt.1} parent=0 // pred_fallthru
    _
  // Predicated region
  $region6: #{setup_nt.1} parent=0 // pred_check
    _
  $region7: #{setup_nt.1} parent=0 // pred_check_branch
    %11 = sbr.rel (0) target = $region9
  $region8: #{setup_nt.1} parent=0 // pred_region
    _
  $region9: #{setup_nt.1} parent=0 // pred_fallthru
    _
  // Predicated region
  $region10: #{setup_nt.1} parent=0 // pred_check
    _
  $region11: #{setup_nt.1} parent=0 // pred_check_branch
    %13 = sbr.rel (0) target = $region13
  $region12: #{setup_nt.1} parent=0 // pred_region
    _
  $region13: #{setup_nt.1} parent=0 // pred_fallthru
    _
  %p14 = scmp.eq.s32.totalorder 0, 0
  // Predicated region
  $region14: #{setup_nt.1} parent=0 // pred_check
    %p15 = pneg %p14
  $region15: #{setup_nt.1} parent=0 // pred_check_branch
    %17 = sbr.rel (%p15) target = $region17
  $region16: #{setup_nt.1} parent=0 // pred_region
    %18 = vst [vmem:[#allocation2] sm:$0xff] 0.0
    %19 = vst [vmem:[#allocation2 + $0x8] sm:$0xff] 0.0
    %20 = vst [vmem:[#allocation2 + $0x10] sm:$0xff] 0.0
    %21 = vst [vmem:[#allocation2 + $0x18] sm:$0xff] 0.0
    %22 = vst [vmem:[#allocation2 + $0x20] sm:$0xff] 0.0
    %23 = vst [vmem:[#allocation2 + $0x28] sm:$0xff] 0.0
    %24 = vst [vmem:[#allocation2 + $0x30] sm:$0xff] 0.0
    %25 = vst [vmem:[#allocation2 + $0x38] sm:$0xff] 0.0
  $region17: #{setup_nt.1} parent=0 // pred_fallthru
    _
  %v26 = vld [vmem:[#allocation2] sm:$0xff]
  %v27 = vld [vmem:[#allocation2 + $0x8] sm:$0xff]
  %v28 = vld [vmem:[#allocation2 + $0x10] sm:$0xff]
  %v29 = vld [vmem:[#allocation2 + $0x18] sm:$0xff]
  %v30 = vld [vmem:[#allocation2 + $0x20] sm:$0xff]
  %v31 = vld [vmem:[#allocation2 + $0x28] sm:$0xff]
  %v32 = vld [vmem:[#allocation2 + $0x30] sm:$0xff]
  %v33 = vld [vmem:[#allocation2 + $0x38] sm:$0xff]
  %v34 = vld [vmem:[%s0] sm:$0xff]
  %v35 = vld [vmem:[%s0 + $0x8] sm:$0xff]
  %v36 = vld [vmem:[%s0 + $0x10] sm:$0xff]
  %v37 = vld [vmem:[%s0 + $0x18] sm:$0xff]
  %v38 = vld [vmem:[%s1] sm:$0xff]
  %v39 = vld [vmem:[%s1 + $0x8] sm:$0xff]
  %v40 = vld [vmem:[%s1 + $0x10] sm:$0xff]
  %v41 = vld [vmem:[%s1 + $0x18] sm:$0xff]
  %v42 = vld [vmem:[%s1 + $0x20] sm:$0xff]
  %v43 = vld [vmem:[%s1 + $0x28] sm:$0xff]
  %v44 = vld [vmem:[%s1 + $0x30] sm:$0xff]
  %v45 = vld [vmem:[%s1 + $0x38] sm:$0xff]
  %vm46 = vcmask 261120
  %v48 = vsel %vm46, %v34, 0
  %v51 = vsel %vm46, %v35, 0
  %v54 = vsel %vm46, %v36, 0
  %v57 = vsel %vm46, %v37, 0
  %59 = vmatprep.subr.mxu0 0.0
  %60 = vmatpush1.msra.mxu0 0.0
  %61 = vmatprep.subr.mxu0 0.0
  %62 = vmatpush1.msra.mxu0 0.0
  %63 = vmatprep.subr.mxu0 0.0
  %64 = vmatpush1.msra.mxu0 0.0
  %65 = vmatprep.subr.mxu0 0.0
  %66 = vmatpush1.msra.mxu0 0.0
  %67 = vmatprep.subr.mxu0 0.0
  %68 = vmatpush1.msra.mxu0 0.0
  %69 = vmatprep.subr.mxu0 0.0
  %70 = vmatpush1.msra.mxu0 0.0
  %71 = vmatprep.subr.mxu0 0.0
  %72 = vmatpush1.msra.mxu0 0.0
  %73 = vmatprep.subr.mxu0 0.0
  %74 = vmatpush1.msra.mxu0 0.0
  %75 = vmatprep.subr.mxu0 0.0
  %76 = vmatpush1.msra.mxu0 0.0
  %77 = vmatprep.subr.mxu0 0.0
  %78 = vmatpush1.msra.mxu0 0.0
  %79 = vmatprep.subr.mxu0 0.0
  %80 = vmatpush1.msra.mxu0 0.0
  %81 = vmatprep.subr.mxu0 0.0
  %82 = vmatpush1.msra.mxu0 0.0
  %83 = vmatprep.subr.mxu0 %v45
  %84 = vmatpush1.msra.mxu0 %v44
  %85 = vmatprep.subr.mxu0 %v43
  %86 = vmatpush1.msra.mxu0 %v42
  %87 = vmatprep.subr.mxu0 %v41
  %88 = vmatpush1.msra.mxu0 %v40
  %89 = vmatprep.subr.mxu0 %v39
  %90 = vmatpush1.msra.mxu0 %v38
  %91 = vmatprep.subr.mxu0 0.0
  %92 = vmatpush2.msra.mxu0 0.0
  %93 = vmatprep.subr.mxu0 0.0
  %94 = vmatpush2.msra.mxu0 0.0
  %95 = vmatprep.subr.mxu0 0.0
  %96 = vmatpush2.msra.mxu0 0.0
  %97 = vmatprep.subr.mxu0 0.0
  %98 = vmatpush2.msra.mxu0 0.0
  %99 = vmatprep.subr.mxu0 0.0
  %100 = vmatpush2.msra.mxu0 0.0
  %101 = vmatprep.subr.mxu0 0.0
  %102 = vmatpush2.msra.mxu0 0.0
  %103 = vmatprep.subr.mxu0 0.0
  %104 = vmatpush2.msra.mxu0 0.0
  %105 = vmatprep.subr.mxu0 0.0
  %106 = vmatpush2.msra.mxu0 0.0
  %107 = vmatprep.subr.mxu0 0.0
  %108 = vmatpush2.msra.mxu0 0.0
  %109 = vmatprep.subr.mxu0 0.0
  %110 = vmatpush2.msra.mxu0 0.0
  %111 = vmatprep.subr.mxu0 0.0
  %112 = vmatpush2.msra.mxu0 0.0
  %113 = vmatprep.subr.mxu0 0.0
  %114 = vmatpush2.msra.mxu0 0.0
  %115 = vmatprep.subr.mxu0 0.0
  %116 = vmatpush2.msra.mxu0 0.0
  %117 = vmatprep.subr.mxu0 0.0
  %118 = vmatpush2.msra.mxu0 0.0
  %119 = vmatprep.subr.mxu0 0.0
  %120 = vmatpush2.msra.mxu0 0.0
  %121 = vmatprep.subr.mxu0 0.0
  %122 = vmatpush2.msra.mxu0 0.0
  %123 = vmatprep.mubr.f32.mxu0 0.0
  %124 = vmatmul.mubr.f32.gmra.mxu0 %v48
  %v125 = vpop.f32.mrf.mxu0
  %v126 = vadd.f32 0.0, %v125
  %v127 = vpop.f32.mrf.mxu0
  %v128 = vadd.f32 0.0, %v127
  %129 = vmatprep.mubr.f32.mxu0 0.0
  %130 = vmatmul.mubr.f32.gmra.mxu0 %v51
  %v131 = vpop.f32.mrf.mxu0
  %v132 = vadd.f32 0.0, %v131
  %v133 = vpop.f32.mrf.mxu0
  %v134 = vadd.f32 0.0, %v133
  %135 = vmatprep.mubr.f32.mxu0 0.0
  %136 = vmatmul.mubr.f32.gmra.mxu0 %v54
  %v137 = vpop.f32.mrf.mxu0
  %v138 = vadd.f32 0.0, %v137
  %v139 = vpop.f32.mrf.mxu0
  %v140 = vadd.f32 0.0, %v139
  %141 = vmatprep.mubr.f32.mxu0 0.0
  %142 = vmatmul.mubr.f32.gmra.mxu0 %v57
  %v143 = vpop.f32.mrf.mxu0
  %v144 = vadd.f32 0.0, %v143
  %v145 = vpop.f32.mrf.mxu0
  %v146 = vadd.f32 0.0, %v145
  %147 = vdwg.mxu0
  %v148 = vadd.f32 %v26, %v126
  %v149 = vadd.f32 %v27, %v128
  %v150 = vadd.f32 %v28, %v132
  %v151 = vadd.f32 %v29, %v134
  %v152 = vadd.f32 %v30, %v138
  %v153 = vadd.f32 %v31, %v140
  %v154 = vadd.f32 %v32, %v144
  %v155 = vadd.f32 %v33, %v146
  %156 = vst [vmem:[#allocation2] sm:$0xff] %v148
  %157 = vst [vmem:[#allocation2 + $0x8] sm:$0xff] %v149
  %158 = vst [vmem:[#allocation2 + $0x10] sm:$0xff] %v150
  %159 = vst [vmem:[#allocation2 + $0x18] sm:$0xff] %v151
  %160 = vst [vmem:[#allocation2 + $0x20] sm:$0xff] %v152
  %161 = vst [vmem:[#allocation2 + $0x28] sm:$0xff] %v153
  %162 = vst [vmem:[#allocation2 + $0x30] sm:$0xff] %v154
  %163 = vst [vmem:[#allocation2 + $0x38] sm:$0xff] %v155
  // Predicated region
  $region18: #{setup_nt.1} parent=0 // pred_check
    %p164 = pneg %p14
  $region19: #{setup_nt.1} parent=0 // pred_check_branch
    %166 = sbr.rel (%p164) target = $region21
  $region20: #{setup_nt.1} parent=0 // pred_region
    %v167 = vld [vmem:[#allocation2] sm:$0xff]
    %v168 = vld [vmem:[#allocation2 + $0x8] sm:$0xff]
    %v169 = vld [vmem:[#allocation2 + $0x10] sm:$0xff]
    %v170 = vld [vmem:[#allocation2 + $0x18] sm:$0xff]
    %v171 = vld [vmem:[#allocation2 + $0x20] sm:$0xff]
    %v172 = vld [vmem:[#allocation2 + $0x28] sm:$0xff]
    %v173 = vld [vmem:[#allocation2 + $0x30] sm:$0xff]
    %v174 = vld [vmem:[#allocation2 + $0x38] sm:$0xff]
    %v175 = vld [vmem:[%s2] sm:$0x3]
    %v177 = vlaneseq
    %v178 = vshrl.u32 %v177, 7
    %v179 = vsub.s32 0, %v178
    %v180 = vrot.slane %v175, %v179
    %v181 = vlaneseq
    %v182 = vshrl.u32 %v181, 7
    %v183 = vsub.s32 1, %v182
    %v184 = vrot.slane %v175, %v183
    %v187 = vadd.f32 %v167, %v180
    %v188 = vadd.f32 %v168, %v184
    %v189 = vadd.f32 %v169, %v180
    %v190 = vadd.f32 %v170, %v184
    %v191 = vadd.f32 %v171, %v180
    %v192 = vadd.f32 %v172, %v184
    %v193 = vadd.f32 %v173, %v180
    %v194 = vadd.f32 %v174, %v184
    %195 = vst [vmem:[%s3] sm:$0xff] %v187
    %196 = vst [vmem:[%s3 + $0x8] sm:$0xff] %v188
    %197 = vst [vmem:[%s3 + $0x10] sm:$0xff] %v189
    %198 = vst [vmem:[%s3 + $0x18] sm:$0xff] %v190
    %199 = vst [vmem:[%s3 + $0x20] sm:$0xff] %v191
    %200 = vst [vmem:[%s3 + $0x28] sm:$0xff] %v192
    %201 = vst [vmem:[%s3 + $0x30] sm:$0xff] %v193
    %202 = vst [vmem:[%s3 + $0x38] sm:$0xff] %v194
  $region21: #{setup_nt.1} parent=0 // pred_fallthru
    _
  // Predicated region
  $region22: #{setup_nt.1} parent=0 // pred_check
    _
  $region23: #{setup_nt.1} parent=0 // pred_check_branch
    %204 = sbr.rel (0) target = $region25
  $region24: #{setup_nt.1} parent=0 // pred_region
    _
  $region25: #{setup_nt.1} parent=0 // pred_fallthru
    _
  // Predicated region
  $region26: #{setup_nt.1} parent=0 // pred_check
    _
  $region27: #{setup_nt.1} parent=0 // pred_check_branch
    %206 = sbr.rel (0) target = $region29
  $region28: #{setup_nt.1} parent=0 // pred_region
    _
  $region29: #{setup_nt.1} parent=0 // pred_fallthru
    _

</llo_original>
